<compile_context>
chip_gen: v7x
topology: tpu7x:2x2x1
jax: 0.10.0
libtpu: 0.0.40
codegen_flags: <defaults>
</compile_context>

<pallas_src>
import functools

import jax
import jax.numpy as jnp
from jax.experimental import pallas as pl
from jax.experimental.pallas import tpu as pltpu


def _patch_embed_kernel(patches_ref, w_ref, addend_ref, cls_ref, out_ref):
    """Fused patch embedding, single invocation (no grid).

    patches_ref: (B*N, K)    patch pixels, compute dtype (bf16)
    w_ref:       (K, E)      conv weight reshaped to a projection matrix (bf16)
    addend_ref:  (N, E)      positions[1:] + conv bias (f32)
    cls_ref:     (1, E)      cls_token + positions[0]  (f32)
    out_ref:     (B, 1+N, E) f32
    """
    B, n_tok, E = out_ref.shape
    N = n_tok - 1

    # Flattened-M matmul on the MXU, f32 accumulation.
    acc = jnp.dot(patches_ref[...], w_ref[...],
                  preferred_element_type=jnp.float32)          # (B*N, E)

    # (B*N, E) -> (B, N, E): leading-dim split; N is a multiple of 8 here so
    # the split is sublane-tile aligned. Fused bias + positional add.
    body = acc.reshape(B, N, E) + addend_ref[...]

    # Fused "concat": patch tokens -> rows 1..N, cls row -> row 0.
    out_ref[:, 1:, :] = body.astype(out_ref.dtype)
    cls_rows = jnp.broadcast_to(cls_ref[...][None], (B, 1, E))
    out_ref[:, 0:1, :] = cls_rows.astype(out_ref.dtype)


def patch_embedding_forward(x, conv_w, conv_b, cls_token, positions, patch_size,
                            compute_dtype=jnp.bfloat16):
    """x: (B, C, H, W) float32 -> (B, 1 + N, E) float32 (ViT PatchEmbedding)."""
    B, C, H, W = x.shape
    P = patch_size
    E = conv_w.shape[0]
    Hp, Wp = H // P, W // P
    N = Hp * Wp
    K = C * P * P
    out_dtype = positions.dtype

    # Patch extraction (Conv2d stride=kernel_size semantics). Pure layout glue;
    # allow_input_fusion below lets XLA fuse this producer into the kernel's
    # operand instead of writing a transposed copy of x to HBM first.
    patches = (x.reshape(B, C, Hp, P, Wp, P)
                .transpose(0, 2, 4, 1, 3, 5)
                .reshape(B * N, K)
                .astype(compute_dtype))

    # Conv weight (E, C, P, P) -> (K, E); flatten order (C, P, P) matches patches.
    w_mat = conv_w.reshape(E, K).T.astype(compute_dtype)

    # Fold the conv bias into the patch positional rows, and the cls positional
    # row into the cls token (tiny parameter-side ops, done once).
    addend = (positions[1:] + conv_b[None, :]).astype(jnp.float32)          # (N, E)
    cls_row = (cls_token.reshape(1, E) + positions[0:1]).astype(jnp.float32)  # (1, E)

    itemsize = jnp.dtype(compute_dtype).itemsize
    cost = pl.CostEstimate(
        flops=2 * B * N * K * E,
        transcendentals=0,
        bytes_accessed=(B * N * K + K * E) * itemsize
        + (N * E + E) * 4
        + B * (1 + N) * E * 4,
    )

    return pl.pallas_call(
        _patch_embed_kernel,
        out_shape=jax.ShapeDtypeStruct((B, 1 + N, E), out_dtype),
        in_specs=[pl.BlockSpec(memory_space=pltpu.MemorySpace.VMEM)] * 4,
        out_specs=pl.BlockSpec(memory_space=pltpu.MemorySpace.VMEM),
        compiler_params=pltpu.CompilerParams(
            allow_input_fusion=[True, False, False, False],
        ),
        cost_estimate=cost,
    )(patches, w_mat, addend, cls_row)


if __name__ == "__main__":
    # img_size=16, patch_size=4, in_channels=3, emb_dim=32, batch=2 -> N=16, seq=17.
    B, C, H, W = 2, 3, 16, 16
    P = 4
    E = 32
    N = (H // P) * (W // P)

    key = jax.random.PRNGKey(0)
    k_x, k_w, k_b, k_cls, k_pos = jax.random.split(key, 5)

    x = jax.random.normal(k_x, (B, C, H, W), dtype=jnp.float32)
    conv_w = jax.random.normal(k_w, (E, C, P, P), dtype=jnp.float32) * 0.02
    conv_b = jax.random.normal(k_b, (E,), dtype=jnp.float32) * 0.02
    cls_token = jax.random.uniform(k_cls, (1, 1, E), dtype=jnp.float32)   # torch.rand
    positions = jax.random.normal(k_pos, (N + 1, E), dtype=jnp.float32)   # torch.randn

    fwd = jax.jit(functools.partial(patch_embedding_forward, patch_size=P))
    out = jax.block_until_ready(fwd(x, conv_w, conv_b, cls_token, positions))

    # Reference in plain JAX, using the same bf16 rounding of the matmul
    # operands (the kernel accumulates in f32 on the MXU).
    patches_ref = (x.reshape(B, C, H // P, P, W // P, P)
                    .transpose(0, 2, 4, 1, 3, 5)
                    .reshape(B, N, C * P * P))
    pr = patches_ref.astype(jnp.bfloat16).astype(jnp.float32)
    wr = conv_w.reshape(E, -1).T.astype(jnp.bfloat16).astype(jnp.float32)
    ref_body = jnp.einsum("bnk,ke->bne", pr, wr, precision="highest")
    ref_body = ref_body + conv_b[None, None, :] + positions[1:][None, :, :]
    ref_cls = jnp.broadcast_to(
        cls_token.reshape(1, 1, E) + positions[0][None, None, :], (B, 1, E))
    ref = jnp.concatenate([ref_cls, ref_body], axis=1)

    assert out.shape == (B, N + 1, E), out.shape
    assert jnp.allclose(out, ref, atol=2e-3, rtol=2e-3), \
        float(jnp.max(jnp.abs(out - ref)))
    print("KERNEL_OK")
</pallas_src>

<mosaic_0001>
module attributes {stable_mosaic.version = 11 : i64} {
  func.func @_patch_embed_kernel(%arg0: memref<32x48xbf16, #tpu.memory_space<vmem>>, %arg1: memref<48x32xbf16, #tpu.memory_space<vmem>>, %arg2: memref<16x32xf32, #tpu.memory_space<vmem>>, %arg3: memref<1x32xf32, #tpu.memory_space<vmem>>, %arg4: memref<2x17x32xf32, #tpu.memory_space<vmem>>) attributes {dimension_semantics = [], scalar_prefetch = 0 : i64, scratch_operands = 0 : i64, tpu.core_type = #tpu.core_type<tc>} {
    %c0 = arith.constant 0 : index
    %c0_0 = arith.constant 0 : index
    %0 = vector.load %arg0[%c0, %c0_0] : memref<32x48xbf16, #tpu.memory_space<vmem>>, vector<32x48xbf16>
    %c0_1 = arith.constant 0 : index
    %c0_2 = arith.constant 0 : index
    %1 = vector.load %arg1[%c0_1, %c0_2] : memref<48x32xbf16, #tpu.memory_space<vmem>>, vector<48x32xbf16>
    %cst = arith.constant dense<0.000000e+00> : vector<32x32xf32>
    %2 = tpu.matmul %0, %1, %cst {dimension_numbers = #tpu.dot_dimension_numbers<[1], [0], [0], [1], [0, 0, 1, 1], [], []>} : vector<32x48xbf16>, vector<48x32xbf16>, vector<32x32xf32> -> vector<32x32xf32>
    %3 = vector.shape_cast %2 : vector<32x32xf32> to vector<2x16x32xf32>
    %c0_3 = arith.constant 0 : index
    %c0_4 = arith.constant 0 : index
    %4 = vector.load %arg2[%c0_3, %c0_4] : memref<16x32xf32, #tpu.memory_space<vmem>>, vector<16x32xf32>
    %5 = vector.shape_cast %4 : vector<16x32xf32> to vector<1x16x32xf32>
    %6 = vector.broadcast %5 : vector<1x16x32xf32> to vector<2x16x32xf32>
    %7 = arith.addf %3, %6 : vector<2x16x32xf32>
    %c0_5 = arith.constant 0 : index
    %c1 = arith.constant 1 : index
    %c0_6 = arith.constant 0 : index
    %8 = vector.load %arg4[%c0_5, %c1, %c0_6] : memref<2x17x32xf32, #tpu.memory_space<vmem>>, vector<2x16x32xf32>
    tpu.vector_store %arg4[%c0_5, %c1, %c0_6], %7 {strides = array<i32>} : memref<2x17x32xf32, #tpu.memory_space<vmem>>, vector<2x16x32xf32>,
    %c0_7 = arith.constant 0 : index
    %c0_8 = arith.constant 0 : index
    %9 = vector.load %arg3[%c0_7, %c0_8] : memref<1x32xf32, #tpu.memory_space<vmem>>, vector<1x32xf32>
    %10 = vector.shape_cast %9 : vector<1x32xf32> to vector<1x1x32xf32>
    %11 = vector.shape_cast %10 : vector<1x1x32xf32> to vector<1x1x32xf32>
    %12 = vector.broadcast %11 : vector<1x1x32xf32> to vector<2x1x32xf32>
    %c0_9 = arith.constant 0 : index
    %c0_10 = arith.constant 0 : index
    %c0_11 = arith.constant 0 : index
    %13 = vector.load %arg4[%c0_9, %c0_10, %c0_11] : memref<2x17x32xf32, #tpu.memory_space<vmem>>, vector<2x1x32xf32>
    tpu.vector_store %arg4[%c0_9, %c0_10, %c0_11], %12 {strides = array<i32>} : memref<2x17x32xf32, #tpu.memory_space<vmem>>, vector<2x1x32xf32>,
    return
  }
}

</mosaic_0001>

<llo_original>
// kernel: patch_embedding_forward.1
$region0: #{patch_embedding_forward.1}
  #allocation0 [shape = 'u32[]', space=smem, size = 0x4, offset = 0x4, fixed_abs, tag = 'smem constant byte address 0x4 - core index']
  #allocation1 [shape = 'u32[144,128]{1,0:T(1,128)}', space=vmem, size = 0x12000, scoped, tag = 'internal scratch']
  %s0 = inlined_call_operand.vmem [shape: bf16[32,48], index: 0, kind: input, shape index: {}]
  %s1 = inlined_call_operand.vmem [shape: bf16[48,32], index: 1, kind: input, shape index: {}]
  %s2 = inlined_call_operand.vmem [shape: f32[16,32], index: 2, kind: input, shape index: {}]
  %s3 = inlined_call_operand.vmem [shape: f32[1,32], index: 3, kind: input, shape index: {}]
  %s4 = inlined_call_operand.vmem [shape: f32[2,17,32], index: 4, kind: output, shape index: {}]
  %s5 = sld [smem:[#allocation0]]
  $region26: #{patch_embedding_forward.1} parent=0
    _
  %s7 = ssub.s32 1, %s5
  %s8 = scalar_select 0, %s7, %s5
  // Predicated region
  $region2: #{patch_embedding_forward.1} parent=0 // pred_check
    _
  $region3: #{patch_embedding_forward.1} parent=0 // pred_check_branch
    %10 = sbr.rel (0) target = $region5
  $region4: #{patch_embedding_forward.1} parent=0 // pred_region
    _
  $region5: #{patch_embedding_forward.1} parent=0 // pred_fallthru
    _
  // Predicated region
  $region6: #{patch_embedding_forward.1} parent=0 // pred_check
    _
  $region7: #{patch_embedding_forward.1} parent=0 // pred_check_branch
    %12 = sbr.rel (0) target = $region9
  $region8: #{patch_embedding_forward.1} parent=0 // pred_region
    _
  $region9: #{patch_embedding_forward.1} parent=0 // pred_fallthru
    _
  // Predicated region
  $region10: #{patch_embedding_forward.1} parent=0 // pred_check
    _
  $region11: #{patch_embedding_forward.1} parent=0 // pred_check_branch
    %14 = sbr.rel (0) target = $region13
  $region12: #{patch_embedding_forward.1} parent=0 // pred_region
    _
  $region13: #{patch_embedding_forward.1} parent=0 // pred_fallthru
    _
  // Predicated region
  $region14: #{patch_embedding_forward.1} parent=0 // pred_check
    _
  $region15: #{patch_embedding_forward.1} parent=0 // pred_check_branch
    %16 = sbr.rel (0) target = $region17
  $region16: #{patch_embedding_forward.1} parent=0 // pred_region
    _
  $region17: #{patch_embedding_forward.1} parent=0 // pred_fallthru
    _
  %v18 = vld [vmem:[%s0] sm:$0xf]
  %v19 = vld [vmem:[%s0 + $0x4] sm:$0xf]
  %v20 = vld [vmem:[%s0 + $0x8] sm:$0xf]
  %v21 = vld [vmem:[%s0 + $0xc] sm:$0xf]
  %v22 = vld [vmem:[%s1] sm:$0xf]
  %v23 = vld [vmem:[%s1 + $0x4] sm:$0xf]
  %v24 = vld [vmem:[%s1 + $0x8] sm:$0xf]
  %v25 = vld [vmem:[%s1 + $0xc] sm:$0xf]
  %v26 = vld [vmem:[%s1 + $0x10] sm:$0xf]
  %v27 = vld [vmem:[%s1 + $0x14] sm:$0xf]
  %v32 = vunpack.c.l.b16 %v18
  %v33 = vunpack.c.l.b16 %v19
  %v34 = vunpack.c.l.b16 %v20
  %v35 = vunpack.c.l.b16 %v21
  %v36 = vpack.c.b16 %v33, %v32
  %v37 = vpack.c.b16 %v35, %v34
  %v44 = vunpack.c.l.b16 %v22
  %v45 = vunpack.c.l.b16 %v23
  %v46 = vunpack.c.l.b16 %v24
  %v47 = vunpack.c.l.b16 %v25
  %v48 = vunpack.c.l.b16 %v26
  %v49 = vunpack.c.l.b16 %v27
  %v50 = vpack.c.b16 %v45, %v44
  %v51 = vpack.c.b16 %v47, %v46
  %v52 = vpack.c.b16 %v49, %v48
  %vm56 = vcmask 392192
  %v58 = vsel %vm56, %v36, 0
  %v61 = vsel %vm56, %v37, 0
  %63 = vmatprep.subr.bf16.mxu0 0
  %64 = vmatpush1.bf16.msra.mxu0 %v50
  %65 = vmatprep.subr.bf16.mxu0 0
  %66 = vmatpush1.bf16.msra.mxu0 %v51
  %67 = vmatprep.subr.bf16.mxu0 0
  %68 = vmatpush1.bf16.msra.mxu0 %v52
  %69 = vmatprep.subr.bf16.mxu0 0
  %70 = vmatpush1.bf16.msra.mxu0 0
  %71 = vmatprep.subr.bf16.mxu0 0
  %72 = vmatpush1.bf16.msra.mxu0 0
  %73 = vmatprep.subr.bf16.mxu0 0
  %74 = vmatpush1.bf16.msra.mxu0 0
  %75 = vmatprep.subr.bf16.mxu0 0
  %76 = vmatpush1.bf16.msra.mxu0 0
  %77 = vmatprep.subr.bf16.mxu0 0
  %78 = vmatpush1.bf16.msra.mxu0 0
  %79 = vmatprep.subr.bf16.mxu0 0
  %80 = vmatpush1.bf16.msra.mxu0 0
  %81 = vmatprep.subr.bf16.mxu0 0
  %82 = vmatpush1.bf16.msra.mxu0 0
  %83 = vmatprep.subr.bf16.mxu0 0
  %84 = vmatpush1.bf16.msra.mxu0 0
  %85 = vmatprep.subr.bf16.mxu0 0
  %86 = vmatpush1.bf16.msra.mxu0 0
  %87 = vmatprep.subr.bf16.mxu0 0
  %88 = vmatpush1.bf16.msra.mxu0 0
  %89 = vmatprep.subr.bf16.mxu0 0
  %90 = vmatpush1.bf16.msra.mxu0 0
  %91 = vmatprep.subr.bf16.mxu0 0
  %92 = vmatpush1.bf16.msra.mxu0 0
  %93 = vmatprep.subr.bf16.mxu0 0
  %94 = vmatpush1.bf16.msra.mxu0 0
  %95 = vmatprep.mubr.bf16.mxu0 0
  %96 = vmatmul.mubr.bf16.gmra.mrb[0].mxu0 %v58
  %v97 = vpop.f32.mrb[0].mxu0
  %v98 = vadd.f32 0.0, %v97
  %v99 = vpop.f32.mrb[0].mxu0
  %v100 = vpop.f32.mrb[0].mxu0
  %v101 = vadd.f32 0.0, %v100
  %v102 = vpop.f32.mrb[0].mxu0
  %103 = vmatprep.mubr.bf16.mxu0 0
  %104 = vmatmul.mubr.bf16.gmra.mrb[0].mxu0 %v61
  %v105 = vpop.f32.mrb[0].mxu0
  %v106 = vadd.f32 0.0, %v105
  %v107 = vpop.f32.mrb[0].mxu0
  %v108 = vpop.f32.mrb[0].mxu0
  %v109 = vadd.f32 0.0, %v108
  %v110 = vpop.f32.mrb[0].mxu0
  %111 = vdwg.mxu0
  %v112 = vld [vmem:[%s2] sm:$0xff]
  %v113 = vld [vmem:[%s2 + $0x8] sm:$0xff]
  %v114 = vadd.f32 %v98, %v112
  %v115 = vadd.f32 %v101, %v113
  %v116 = vadd.f32 %v106, %v112
  %v117 = vadd.f32 %v109, %v113
  %vm118 = vcmask 261120
  %119 = vst.msk [vmem:[%s4 + $0x1] sm:$0xff] %vm118, %v114
  %120 = vst.msk [vmem:[%s4 + $0x9] sm:$0xff] %vm118, %v115
  %121 = vst.msk [vmem:[%s4 + $0x19] sm:$0xff] %vm118, %v116
  %122 = vst.msk [vmem:[%s4 + $0x21] sm:$0xff] %vm118, %v117
  %v123 = vld [vmem:[%s3] sm:$0x1]
  %vm124 = vcmask 253952
  %125 = vst.msk [vmem:[%s4] sm:$0x1] %vm124, %v123
  %126 = vst.msk [vmem:[%s4 + $0x18] sm:$0x1] %vm124, %v123
  // Predicated region
  $region18: #{patch_embedding_forward.1} parent=0 // pred_check
    _
  $region19: #{patch_embedding_forward.1} parent=0 // pred_check_branch
    %128 = sbr.rel (0) target = $region21
  $region20: #{patch_embedding_forward.1} parent=0 // pred_region
    _
  $region21: #{patch_embedding_forward.1} parent=0 // pred_fallthru
    _
  // Predicated region
  $region22: #{patch_embedding_forward.1} parent=0 // pred_check
    _
  $region23: #{patch_embedding_forward.1} parent=0 // pred_check_branch
    %130 = sbr.rel (0) target = $region25
  $region24: #{patch_embedding_forward.1} parent=0 // pred_region
    _
  $region25: #{patch_embedding_forward.1} parent=0 // pred_fallthru
    _

</llo_original>
